<compile_context>
chip_gen: v7x
topology: tpu7x:2x2x1
jax: 0.10.0
libtpu: 0.0.40
codegen_flags: <defaults>
</compile_context>

<pallas_src>
import functools

import jax
import jax.numpy as jnp
from jax import lax
from jax.experimental import pallas as pl
from jax.experimental.pallas import tpu as pltpu

ALPHA = 0.5
GAMMA = 2
IGNORE_INDEX = 255


def _focal_loss_kernel(preds_ref, lab_ref, out_ref, sum_ref, cnt_ref,
                       *, alpha, gamma, ignore_index, total_pix, tile_pix):
    n = pl.program_id(0)   # batch
    t = pl.program_id(1)   # pixel tile (reduction axis)

    @pl.when(jnp.logical_and(n == 0, t == 0))
    def _init():
        sum_ref[...] = jnp.zeros_like(sum_ref)
        cnt_ref[...] = jnp.zeros_like(cnt_ref)

    logits = preds_ref[0].astype(jnp.float32)     # (C, TILE_PIX): classes on sublanes, pixels on lanes
    labels = lab_ref[0]                           # (1, TILE_PIX) int32
    C = logits.shape[0]

    # Numerically stable log-sum-exp across the small class (sublane) axis.
    m = jnp.max(logits, axis=0, keepdims=True)                              # (1, TILE_PIX)
    lse = m + jnp.log(jnp.sum(jnp.exp(logits - m), axis=0, keepdims=True))  # (1, TILE_PIX)

    # valid = (label != ignore_index) AND (global pixel index in range).
    # The global-index mask handles a ragged last tile without any host-side pad.
    pix = t * tile_pix + lax.broadcasted_iota(jnp.int32, (1, tile_pix), 1)
    valid = jnp.logical_and(labels != ignore_index, pix < total_pix)

    # Gather logit of the target class via a one-hot select over sublanes.
    safe_lab = jnp.where(valid, labels, 0)
    class_ids = lax.broadcasted_iota(jnp.int32, (C, tile_pix), 0)
    onehot = class_ids == safe_lab                                          # (C, TILE_PIX)
    tgt = jnp.sum(jnp.where(onehot, logits, 0.0), axis=0, keepdims=True)    # (1, TILE_PIX)

    ce = jnp.where(valid, lse - tgt, 0.0)                                   # masked per-pixel CE
    sum_ref[...] += jnp.sum(ce, axis=1, keepdims=True)
    cnt_ref[...] += jnp.sum(valid.astype(jnp.float32), axis=1, keepdims=True)

    @pl.when(jnp.logical_and(n == pl.num_programs(0) - 1,
                             t == pl.num_programs(1) - 1))
    def _finalize():
        mean_ce = sum_ref[...] / cnt_ref[...]     # nn.CrossEntropyLoss(mean over valid pixels)
        logpt = -mean_ce
        pt = jnp.exp(logpt)
        out_ref[...] = -((1.0 - pt) ** gamma) * alpha * logpt


def focal_loss(preds, labels, *, alpha=ALPHA, gamma=GAMMA,
               ignore_index=IGNORE_INDEX, tile_pix=None):
    """preds: [N, C, H, W] float logits; labels: [N, H, W] (or [1, N, H, W]) int."""
    # mimic labels.squeeze(0) from the PyTorch module (no-op unless leading dim == 1)
    if labels.ndim == 4 and labels.shape[0] == 1:
        labels = labels[0]

    N, C, H, W = preds.shape
    HW = H * W

    # Free reshapes only — no transpose, no pad, no extra HBM traffic.
    p = preds.reshape(N, C, HW).astype(jnp.float32)
    l = labels.reshape(N, 1, HW).astype(jnp.int32)

    if tile_pix is None:
        # ~1 MiB of logits per block (lane-aligned), capped at the pixel extent.
        # Double-buffered working set stays a few MiB -> fits the default scoped
        # VMEM on v5e (16 MiB) / v6e / v7x (32 MiB) with plenty of headroom.
        target = max(128, ((1 << 20) // (C * 4)) // 128 * 128)
        hw_pad = ((HW + 127) // 128) * 128
        tile_pix = min(target, hw_pad)
    n_tiles = pl.cdiv(HW, tile_pix)

    kernel = functools.partial(_focal_loss_kernel, alpha=alpha, gamma=gamma,
                               ignore_index=ignore_index,
                               total_pix=HW, tile_pix=tile_pix)

    rows = N * HW
    cost = pl.CostEstimate(
        flops=6 * rows * C,
        transcendentals=rows * C + rows,
        bytes_accessed=rows * C * 4 + rows * 4 + 4,
    )

    # TODO(synk): on v7x (2 TensorCores) split the batch/tile range with a
    # "parallel" axis and per-core partial (sum, cnt) outputs for ~2x.
    out = pl.pallas_call(
        kernel,
        out_shape=jax.ShapeDtypeStruct((1, 1), jnp.float32),
        grid_spec=pltpu.PrefetchScalarGridSpec(
            num_scalar_prefetch=0,
            grid=(N, n_tiles),
            in_specs=[pl.BlockSpec((1, C, tile_pix), lambda n, t: (n, 0, t)),
                      pl.BlockSpec((1, 1, tile_pix), lambda n, t: (n, 0, t))],
            out_specs=pl.BlockSpec((1, 1), lambda n, t: (0, 0)),
            scratch_shapes=[pltpu.VMEM((1, 1), jnp.float32),   # running CE sum
                            pltpu.VMEM((1, 1), jnp.float32)],  # running valid count
        ),
        compiler_params=pltpu.CompilerParams(
            dimension_semantics=("arbitrary", "arbitrary")),
        cost_estimate=cost,
    )(p, l)
    return out[0, 0]


def _reference(preds, labels, *, alpha=ALPHA, gamma=GAMMA, ignore_index=IGNORE_INDEX):
    # pure-JAX reference of the same math (for a quick sanity check)
    N, C, H, W = preds.shape
    p = jnp.transpose(preds, (0, 2, 3, 1)).reshape(-1, C).astype(jnp.float32)
    l = labels.reshape(-1).astype(jnp.int32)
    logp = jax.nn.log_softmax(p, axis=-1)
    valid = l != ignore_index
    nll = -jnp.take_along_axis(logp, jnp.where(valid, l, 0)[:, None], axis=-1)[:, 0]
    ce = jnp.sum(jnp.where(valid, nll, 0.0)) / jnp.sum(valid.astype(jnp.float32))
    logpt = -ce
    pt = jnp.exp(logpt)
    return -((1.0 - pt) ** gamma) * alpha * logpt


if __name__ == "__main__":
    key = jax.random.PRNGKey(0)
    k_preds, k_labels, k_ignore = jax.random.split(key, 3)

    N, C, H, W = 2, 4, 16, 16
    preds = jax.random.normal(k_preds, (N, C, H, W), dtype=jnp.float32)
    labels = jax.random.randint(k_labels, (N, H, W), 0, C, dtype=jnp.int32)
    # sprinkle some ignore_index pixels to exercise the masking path
    ignore_mask = jax.random.bernoulli(k_ignore, 0.1, (N, H, W))
    labels = jnp.where(ignore_mask, IGNORE_INDEX, labels)

    loss = focal_loss(preds, labels)
    loss = jax.block_until_ready(loss)

    ref = _reference(preds, labels)
    assert jnp.allclose(loss, ref, atol=1e-5, rtol=1e-5), (loss, ref)

    print("KERNEL_OK")
</pallas_src>

<mosaic_0001>
module attributes {stable_mosaic.version = 11 : i64} {
  func.func @_focal_loss_kernel(%arg0: i32, %arg1: i32, %arg2: memref<1x4x256xf32, #tpu.memory_space<vmem>>, %arg3: memref<1x1x256xi32, #tpu.memory_space<vmem>>, %arg4: memref<1x1xf32, #tpu.memory_space<vmem>>, %arg5: memref<1x1xf32, #tpu.memory_space<vmem>>, %arg6: memref<1x1xf32, #tpu.memory_space<vmem>>) attributes {dimension_semantics = [#tpu.dimension_semantics<arbitrary>, #tpu.dimension_semantics<arbitrary>], iteration_bounds = array<i64: 2, 1>, scalar_prefetch = 0 : i64, scratch_operands = 2 : i64, tpu.core_type = #tpu.core_type<tc>, window_params = [{transform_indices = @transform_0, window_bounds = array<i64: 1, 4, 256>}, {transform_indices = @transform_1, window_bounds = array<i64: 1, 1, 256>}, {pipeline_mode = #tpu.pipeline_mode<synchronous>, transform_indices = @transform_2, window_bounds = array<i64: 1, 1>}]} {
    %c0_i32 = arith.constant 0 : i32
    %0 = arith.cmpi eq, %arg0, %c0_i32 : i32
    %c0_i32_0 = arith.constant 0 : i32
    %1 = arith.cmpi eq, %arg1, %c0_i32_0 : i32
    %2 = arith.andi %0, %1 : i1
    %3 = arith.extui %2 : i1 to i32
    %c0_i32_1 = arith.constant 0 : i32
    %4 = arith.cmpi ne, %3, %c0_i32_1 : i32
    scf.if %4 {
      %cst_25 = arith.constant 0.000000e+00 : f32
      %56 = vector.broadcast %cst_25 : f32 to vector<1x1xf32>
      %c0_26 = arith.constant 0 : index
      %c0_27 = arith.constant 0 : index
      %57 = vector.load %arg5[%c0_26, %c0_27] : memref<1x1xf32, #tpu.memory_space<vmem>>, vector<1x1xf32>
      tpu.vector_store %arg5[%c0_26, %c0_27], %56 {strides = array<i32>} : memref<1x1xf32, #tpu.memory_space<vmem>>, vector<1x1xf32>,
      %cst_28 = arith.constant 0.000000e+00 : f32
      %58 = vector.broadcast %cst_28 : f32 to vector<1x1xf32>
      %c0_29 = arith.constant 0 : index
      %c0_30 = arith.constant 0 : index
      %59 = vector.load %arg6[%c0_29, %c0_30] : memref<1x1xf32, #tpu.memory_space<vmem>>, vector<1x1xf32>
      tpu.vector_store %arg6[%c0_29, %c0_30], %58 {strides = array<i32>} : memref<1x1xf32, #tpu.memory_space<vmem>>, vector<1x1xf32>,
    } else {
    }
    %c0 = arith.constant 0 : index
    %c0_2 = arith.constant 0 : index
    %c0_3 = arith.constant 0 : index
    %5 = vector.load %arg2[%c0, %c0_2, %c0_3] : memref<1x4x256xf32, #tpu.memory_space<vmem>>, vector<1x4x256xf32>
    %6 = vector.shape_cast %5 : vector<1x4x256xf32> to vector<4x256xf32>
    %c0_4 = arith.constant 0 : index
    %c0_5 = arith.constant 0 : index
    %c0_6 = arith.constant 0 : index
    %7 = vector.load %arg3[%c0_4, %c0_5, %c0_6] : memref<1x1x256xi32, #tpu.memory_space<vmem>>, vector<1x1x256xi32>
    %8 = vector.shape_cast %7 : vector<1x1x256xi32> to vector<1x256xi32>
    %cst = arith.constant dense<0xFF800000> : vector<256xf32>
    %9 = vector.multi_reduction <maximumf>, %6, %cst [0] : vector<4x256xf32> to vector<256xf32>
    %10 = vector.shape_cast %9 : vector<256xf32> to vector<1x256xf32>
    %11 = vector.broadcast %10 : vector<1x256xf32> to vector<4x256xf32>
    %12 = arith.subf %6, %11 : vector<4x256xf32>
    %13 = math.exp %12 : vector<4x256xf32>
    %cst_7 = arith.constant dense<0.000000e+00> : vector<256xf32>
    %14 = vector.multi_reduction <add>, %13, %cst_7 [0] : vector<4x256xf32> to vector<256xf32>
    %15 = vector.shape_cast %14 : vector<256xf32> to vector<1x256xf32>
    %16 = math.log %15 : vector<1x256xf32>
    %17 = arith.addf %10, %16 : vector<1x256xf32>
    %c256_i32 = arith.constant 256 : i32
    %18 = arith.muli %arg1, %c256_i32 : i32
    %19 = tpu.iota {dimensions = array<i32: 1>} : vector<1x256xi32>
    %20 = vector.broadcast %18 : i32 to vector<1x256xi32>
    %21 = arith.addi %20, %19 : vector<1x256xi32>
    %c255_i32 = arith.constant 255 : i32
    %22 = vector.broadcast %c255_i32 : i32 to vector<1x256xi32>
    %23 = arith.cmpi ne, %8, %22 : vector<1x256xi32>
    %c256_i32_8 = arith.constant 256 : i32
    %24 = vector.broadcast %c256_i32_8 : i32 to vector<1x256xi32>
    %25 = arith.cmpi slt, %21, %24 : vector<1x256xi32>
    %26 = arith.andi %23, %25 : vector<1x256xi1>
    %c0_i32_9 = arith.constant 0 : i32
    %27 = vector.broadcast %c0_i32_9 : i32 to vector<1x256xi32>
    %28 = arith.select %26, %8, %27 : vector<1x256xi1>, vector<1x256xi32>
    %29 = tpu.iota {dimensions = array<i32: 0>} : vector<4x256xi32>
    %30 = vector.broadcast %28 : vector<1x256xi32> to vector<4x256xi32>
    %31 = arith.cmpi eq, %29, %30 : vector<4x256xi32>
    %cst_10 = arith.constant 0.000000e+00 : f32
    %32 = vector.broadcast %cst_10 : f32 to vector<4x256xf32>
    %33 = arith.select %31, %6, %32 : vector<4x256xi1>, vector<4x256xf32>
    %cst_11 = arith.constant dense<0.000000e+00> : vector<256xf32>
    %34 = vector.multi_reduction <add>, %33, %cst_11 [0] : vector<4x256xf32> to vector<256xf32>
    %35 = vector.shape_cast %34 : vector<256xf32> to vector<1x256xf32>
    %36 = arith.subf %17, %35 : vector<1x256xf32>
    %cst_12 = arith.constant 0.000000e+00 : f32
    %37 = vector.broadcast %cst_12 : f32 to vector<1x256xf32>
    %38 = arith.select %26, %36, %37 : vector<1x256xi1>, vector<1x256xf32>
    %c0_13 = arith.constant 0 : index
    %c0_14 = arith.constant 0 : index
    %39 = vector.load %arg5[%c0_13, %c0_14] : memref<1x1xf32, #tpu.memory_space<vmem>>, vector<1x1xf32>
    %cst_15 = arith.constant dense<0.000000e+00> : vector<1xf32>
    %40 = vector.multi_reduction <add>, %38, %cst_15 [1] : vector<1x256xf32> to vector<1xf32>
    %41 = vector.shape_cast %40 : vector<1xf32> to vector<1x1xf32>
    %42 = arith.addf %39, %41 : vector<1x1xf32>
    %c0_16 = arith.constant 0 : index
    %c0_17 = arith.constant 0 : index
    %43 = vector.load %arg5[%c0_16, %c0_17] : memref<1x1xf32, #tpu.memory_space<vmem>>, vector<1x1xf32>
    tpu.vector_store %arg5[%c0_16, %c0_17], %42 {strides = array<i32>} : memref<1x1xf32, #tpu.memory_space<vmem>>, vector<1x1xf32>,
    %c0_18 = arith.constant 0 : index
    %c0_19 = arith.constant 0 : index
    %44 = vector.load %arg6[%c0_18, %c0_19] : memref<1x1xf32, #tpu.memory_space<vmem>>, vector<1x1xf32>
    %45 = arith.extui %26 : vector<1x256xi1> to vector<1x256xi32>
    %46 = arith.sitofp %45 : vector<1x256xi32> to vector<1x256xf32>
    %cst_20 = arith.constant dense<0.000000e+00> : vector<1xf32>
    %47 = vector.multi_reduction <add>, %46, %cst_20 [1] : vector<1x256xf32> to vector<1xf32>
    %48 = vector.shape_cast %47 : vector<1xf32> to vector<1x1xf32>
    %49 = arith.addf %44, %48 : vector<1x1xf32>
    %c0_21 = arith.constant 0 : index
    %c0_22 = arith.constant 0 : index
    %50 = vector.load %arg6[%c0_21, %c0_22] : memref<1x1xf32, #tpu.memory_space<vmem>>, vector<1x1xf32>
    tpu.vector_store %arg6[%c0_21, %c0_22], %49 {strides = array<i32>} : memref<1x1xf32, #tpu.memory_space<vmem>>, vector<1x1xf32>,
    %c1_i32 = arith.constant 1 : i32
    %51 = arith.cmpi eq, %arg0, %c1_i32 : i32
    %c0_i32_23 = arith.constant 0 : i32
    %52 = arith.cmpi eq, %arg1, %c0_i32_23 : i32
    %53 = arith.andi %51, %52 : i1
    %54 = arith.extui %53 : i1 to i32
    %c0_i32_24 = arith.constant 0 : i32
    %55 = arith.cmpi ne, %54, %c0_i32_24 : i32
    scf.if %55 {
      %c0_25 = arith.constant 0 : index
      %c0_26 = arith.constant 0 : index
      %56 = vector.load %arg5[%c0_25, %c0_26] : memref<1x1xf32, #tpu.memory_space<vmem>>, vector<1x1xf32>
      %c0_27 = arith.constant 0 : index
      %c0_28 = arith.constant 0 : index
      %57 = vector.load %arg6[%c0_27, %c0_28] : memref<1x1xf32, #tpu.memory_space<vmem>>, vector<1x1xf32>
      %58 = arith.divf %56, %57 : vector<1x1xf32>
      %cst_29 = arith.constant 0.000000e+00 : f32
      %59 = vector.broadcast %cst_29 : f32 to vector<1x1xf32>
      %60 = arith.subf %59, %58 : vector<1x1xf32>
      %61 = math.exp %60 : vector<1x1xf32>
      %cst_30 = arith.constant 1.000000e+00 : f32
      %62 = vector.broadcast %cst_30 : f32 to vector<1x1xf32>
      %63 = arith.subf %62, %61 : vector<1x1xf32>
      %64 = arith.mulf %63, %63 : vector<1x1xf32>
      %cst_31 = arith.constant 0.000000e+00 : f32
      %65 = vector.broadcast %cst_31 : f32 to vector<1x1xf32>
      %66 = arith.subf %65, %64 : vector<1x1xf32>
      %cst_32 = arith.constant 5.000000e-01 : f32
      %67 = vector.broadcast %cst_32 : f32 to vector<1x1xf32>
      %68 = arith.mulf %66, %67 : vector<1x1xf32>
      %69 = arith.mulf %68, %60 : vector<1x1xf32>
      %c0_33 = arith.constant 0 : index
      %c0_34 = arith.constant 0 : index
      %70 = vector.load %arg4[%c0_33, %c0_34] : memref<1x1xf32, #tpu.memory_space<vmem>>, vector<1x1xf32>
      tpu.vector_store %arg4[%c0_33, %c0_34], %69 {strides = array<i32>} : memref<1x1xf32, #tpu.memory_space<vmem>>, vector<1x1xf32>,
    } else {
    }
    return
  }
  func.func @transform_0(%arg0: i32, %arg1: i32) -> (i32, i32, i32) {
    %c0_i32 = arith.constant 0 : i32
    %c0_i32_0 = arith.constant 0 : i32
    return %arg0, %c0_i32, %arg1 : i32, i32, i32
  }
  func.func @transform_1(%arg0: i32, %arg1: i32) -> (i32, i32, i32) {
    %c0_i32 = arith.constant 0 : i32
    %c0_i32_0 = arith.constant 0 : i32
    return %arg0, %c0_i32, %arg1 : i32, i32, i32
  }
  func.func @transform_2(%arg0: i32, %arg1: i32) -> (i32, i32) {
    %c0_i32 = arith.constant 0 : i32
    %c0_i32_0 = arith.constant 0 : i32
    %c0_i32_1 = arith.constant 0 : i32
    return %c0_i32, %c0_i32_0 : i32, i32
  }
}

</mosaic_0001>

<llo_original>
// kernel: tpu_custom_call.1
$region0: #{tpu_custom_call.1}
  #allocation0 [shape = 'u32[]', space=smem, size = 0x4, offset = 0x4, fixed_abs, tag = 'smem constant byte address 0x4 - core index']
  #allocation1 [shape = 'u32[144,128]{1,0:T(1,128)}', space=vmem, size = 0x12000, scoped, tag = 'internal scratch']
  #allocation2 [shape = 'f32[1,1]{1,0:T(1,128)}', space=vmem, size = 0x200, scoped, tag = 'scratch operand']
  #allocation3 [shape = 'f32[1,1]{1,0:T(1,128)}', space=vmem, size = 0x200, scoped, tag = 'scratch operand']
  %s0 = inlined_call_operand.hbm [shape: f32[2,4,256], index: 0, kind: input, shape index: {}]
  %s1 = inlined_call_operand.hbm [shape: s32[2,1,256], index: 1, kind: input, shape index: {}]
  %s2 = inlined_call_operand.hbm [shape: f32[1,1], index: 2, kind: output, shape index: {}]
  %s3 = sld [smem:[#allocation0]]
  $region57: #{tpu_custom_call.1} parent=0
    _
  %s5 = ssub.s32 1, %s3
  %s6 = scalar_select 0, %s5, %s3
  $region1: #{tpu_custom_call.1} parent=0
    #allocation4 [shape = 'u8[8192]{0}', space=vmem, size = 0x2000, scoped, tag = 'input window, operand 0']
    #allocation5 [shape = 's32[2]{0}', space=sflag, size = 0x8, scoped, tag = 'scoped memory for tpu_custom_call.1']
    #allocation6 [shape = 's32[2]{0}', space=sflag, size = 0x8, scoped, tag = 'scoped memory for tpu_custom_call.1']
    #allocation7 [shape = 'u8[2048]{0}', space=vmem, size = 0x800, scoped, tag = 'input window, operand 1']
    #allocation8 [shape = 's32[2]{0}', space=sflag, size = 0x8, scoped, tag = 'scoped memory for tpu_custom_call.1']
    #allocation9 [shape = 'u8[512]{0}', space=vmem, size = 0x400, scoped, tag = 'output window, operand 0, single buffered']
    %7 = vsyncpa [#allocation5], 0
    %s8 = scalar_lea.sflag [#allocation5], 1
    %9 = vsyncpa %s8, 0
    %10 = vsyncpa [#allocation8], 0
    %s11 = scalar_lea.sflag [#allocation8], 1
    %12 = vsyncpa %s11, 0
    %13 = vsyncpa [#allocation6], 0
    loop: start=0, step=1, limit=4
    $region2: #{tpu_custom_call.1} parent=1 // loop_pre_header
      _
    $region3: #{tpu_custom_call.1} parent=1 // loop_header
      %s15 = sphi 0, %s19
      %p16 = scmp.ge.s32.totalorder %s15, 4
      %s22 = sphi 0, %s34
      %s23 = sphi 0, %s30
      %s24 = sphi 0, %s22
      %s25 = sphi 0, %s23
      %s26 = sphi 0, %s24
      %s27 = sphi 0, %s25
      %s39 = sphi 0, %s41
      %s42 = sphi 0, %s39
      %s43 = sphi 0, %s42
      %s59 = sphi 0, %s43
      %s67 = sphi 0, %s69
      %s70 = sphi 0, %s67
      %s71 = sphi 0, %s70
      %s87 = sphi 0, %s71
      %s91 = sphi 0, %s91
      %s93 = sphi 0, %s91
      %s94 = sphi 0, %s93
      %s108 = sphi 0, %s94
    $region4: #{tpu_custom_call.1} parent=1 // loop_header_branch
      %18 = sbr.rel (%p16) target = $region8
    $region5: #{tpu_custom_call.1} parent=1 // loop_body
      %s20 = ssub.s32 %s15, 1
      %s21 = ssub.s32 %s15, 2
      %s28 = sadd.s32 1, %s23
      %p29 = scmp.ge.s32.totalorder %s28, 1
      %s30 = scalar_select %p29, 0, %s28
      %s31 = sadd.s32 1, %s22
      %s32 = scalar_select %p29, %s31, %s22
      %p33 = scmp.ge.s32.totalorder %s32, 2
      %s34 = scalar_select %p33, 0, %s32
      %s35 = ssub.s32 %s22, %s34
      %s36 = ssub.s32 %s23, %s30
      %s37 = sor.u32 %s35, %s36
      %p38 = scmp.eq.s32.totalorder %s37, 0
      %s40 = sadd.s32 %s39, 1
      %s41 = scalar_select %p38, %s39, %s40
      %p44 = pneg %p38
      %p45 = scmp.eq.s32.totalorder %s15, 1
      %p46 = por %p44, %p45
      %p47 = scmp.ne.s32.totalorder %s39, %s42
      %p48 = scmp.eq.s32.totalorder %s15, 0
      %p49 = por %p47, %p48
      %p50 = scmp.ne.s32.totalorder %s39, %s42
      %p51 = scmp.eq.s32.totalorder %s20, 1
      %p52 = por %p50, %p51
      %p53 = scmp.ne.s32.totalorder %s42, %s43
      %p54 = scmp.eq.s32.totalorder %s20, 0
      %p55 = por %p53, %p54
      %p56 = scmp.ne.s32.totalorder %s42, %s43
      %p57 = scmp.eq.s32.totalorder %s21, 1
      %p58 = por %p56, %p57
      %p60 = scmp.ne.s32.totalorder %s43, %s59
      %p61 = scmp.eq.s32.totalorder %s21, 0
      %p62 = por %p60, %p61
      %s63 = ssub.s32 %s22, %s34
      %s64 = ssub.s32 %s23, %s30
      %s65 = sor.u32 %s63, %s64
      %p66 = scmp.eq.s32.totalorder %s65, 0
      %s68 = sadd.s32 %s67, 1
      %s69 = scalar_select %p66, %s67, %s68
      %p72 = pneg %p66
      %p73 = scmp.eq.s32.totalorder %s15, 1
      %p74 = por %p72, %p73
      %p75 = scmp.ne.s32.totalorder %s67, %s70
      %p76 = scmp.eq.s32.totalorder %s15, 0
      %p77 = por %p75, %p76
      %p78 = scmp.ne.s32.totalorder %s67, %s70
      %p79 = scmp.eq.s32.totalorder %s20, 1
      %p80 = por %p78, %p79
      %p81 = scmp.ne.s32.totalorder %s70, %s71
      %p82 = scmp.eq.s32.totalorder %s20, 0
      %p83 = por %p81, %p82
      %p84 = scmp.ne.s32.totalorder %s70, %s71
      %p85 = scmp.eq.s32.totalorder %s21, 1
      %p86 = por %p84, %p85
      %p88 = scmp.ne.s32.totalorder %s71, %s87
      %p89 = scmp.eq.s32.totalorder %s21, 0
      %p90 = por %p88, %p89
      %s92 = sadd.s32 %s91, 1
      %p95 = scmp.eq.s32.totalorder %s15, 1
      %p96 = scmp.ne.s32.totalorder %s91, %s93
      %p97 = scmp.eq.s32.totalorder %s15, 0
      %p98 = por %p96, %p97
      %p99 = scmp.ne.s32.totalorder %s91, %s93
      %p100 = scmp.eq.s32.totalorder %s20, 1
      %p101 = por %p99, %p100
      %p102 = scmp.ne.s32.totalorder %s93, %s94
      %p103 = scmp.eq.s32.totalorder %s20, 0
      %p104 = por %p102, %p103
      %p105 = scmp.ne.s32.totalorder %s93, %s94
      %p106 = scmp.eq.s32.totalorder %s21, 1
      %p107 = por %p105, %p106
      %p109 = scmp.ne.s32.totalorder %s94, %s108
      %p110 = scmp.eq.s32.totalorder %s21, 0
      %p111 = por %p109, %p110
      %p112 = scmp.le.s32.totalorder 1, %s15
      %p113 = scmp.lt.s32.totalorder %s15, 3
      %p114 = pnand %p112, %p113
      %p115 = pneg %p114
      // Predicated region
      $region9: #{tpu_custom_call.1} parent=5 // pred_check
        _
      $region10: #{tpu_custom_call.1} parent=5 // pred_check_branch
        %117 = sbr.rel (%p114) target = $region12
      $region11: #{tpu_custom_call.1} parent=5 // pred_region
        %s118 = ssub.s32 %s15, 1
      $region12: #{tpu_custom_call.1} parent=5 // pred_fallthru
        _
      %p119 = scmp.lt.s32.totalorder %s15, 2
      // Predicated region
      $region13: #{tpu_custom_call.1} parent=5 // pred_check
        %p120 = pneg %p119
      $region14: #{tpu_custom_call.1} parent=5 // pred_check_branch
        %122 = sbr.rel (%p120) target = $region16
      $region15: #{tpu_custom_call.1} parent=5 // pred_region
        // Predicated region
        $region17: #{tpu_custom_call.1} parent=15 // pred_check
          %p123 = pneg %p49
        $region18: #{tpu_custom_call.1} parent=15 // pred_check_branch
          %125 = sbr.rel (%p123) target = $region20
        $region19: #{tpu_custom_call.1} parent=15 // pred_region
          %s126 = sand.u32 %s39, 1
          %s127 = scalar_lea.sflag [#allocation5], %s126
          %s128 = sand.u32 %s39, 1
          %s129 = smul.addr %s128, 8
          %s130 = scalar_lea.vmem [#allocation4], %s129
          %s131 = smul.u32 2, %s23
          %s133 = ssub.s32 128, 128
          %134 = vsyncadd %s127, %s133
          %s135 = smul.addr %s22, 2
          %s136 = sadd.s32 %s131, %s135
          %s137 = smul.addr %s136, 64
          %s138 = scalar_lea.hbm %s0, %s137
          %s140 = sshll.u32 %s130, 4
          %s141 = int_to_ptr.vmem [resolvable:$true] %s140
          %143 = dma.hbm_to_vmem [thread:$0]  %s138, 128, %s141, %s127
        $region20: #{tpu_custom_call.1} parent=15 // pred_fallthru
          _
        // Predicated region
        $region21: #{tpu_custom_call.1} parent=15 // pred_check
          %p144 = pneg %p77
        $region22: #{tpu_custom_call.1} parent=15 // pred_check_branch
          %146 = sbr.rel (%p144) target = $region24
        $region23: #{tpu_custom_call.1} parent=15 // pred_region
          %s147 = sand.u32 %s67, 1
          %s148 = scalar_lea.sflag [#allocation8], %s147
          %s149 = sand.u32 %s67, 1
          %s150 = smul.addr %s149, 2
          %s151 = scalar_lea.vmem [#allocation7], %s150
          %s152 = smul.u32 2, %s23
          %s154 = ssub.s32 32, 32
          %155 = vsyncadd %s148, %s154
          %s156 = smul.addr %s22, 2
          %s157 = sadd.s32 %s152, %s156
          %s158 = smul.addr %s157, 16
          %s159 = scalar_lea.hbm %s1, %s158
          %s161 = sshll.u32 %s151, 4
          %s162 = int_to_ptr.vmem [resolvable:$true] %s161
          %164 = dma.hbm_to_vmem [thread:$0]  %s159, 32, %s162, %s148
        $region24: #{tpu_custom_call.1} parent=15 // pred_fallthru
          _
      $region16: #{tpu_custom_call.1} parent=5 // pred_fallthru
        _
      %p165 = scmp.le.s32.totalorder 1, %s15
      %p166 = scmp.lt.s32.totalorder %s15, 3
      %p167 = pnand %p165, %p166
      %p168 = pneg %p167
      // Predicated region
      $region25: #{tpu_custom_call.1} parent=5 // pred_check
        _
      $region26: #{tpu_custom_call.1} parent=5 // pred_check_branch
        %170 = sbr.rel (%p167) target = $region28
      $region27: #{tpu_custom_call.1} parent=5 // pred_region
        %s171 = ssub.s32 %s15, 1
        %s172 = sand.u32 %s42, 1
        %s173 = scalar_lea.sflag [#allocation5], %s172
        %s174 = sand.u32 %s42, 1
        %s175 = smul.addr %s174, 8
        %s176 = scalar_lea.vmem [#allocation4], %s175
        // Predicated region
        $region29: #{tpu_custom_call.1} parent=27 // pred_check
          %p177 = pneg %p55
        $region30: #{tpu_custom_call.1} parent=27 // pred_check_branch
          %179 = sbr.rel (%p177) target = $region32
        $region31: #{tpu_custom_call.1} parent=27 // pred_region
          %180 = dma.done %s173, 128
        $region32: #{tpu_custom_call.1} parent=27 // pred_fallthru
          _
        %s181 = sand.u32 %s70, 1
        %s182 = scalar_lea.sflag [#allocation8], %s181
        %s183 = sand.u32 %s70, 1
        %s184 = smul.addr %s183, 2
        %s185 = scalar_lea.vmem [#allocation7], %s184
        // Predicated region
        $region33: #{tpu_custom_call.1} parent=27 // pred_check
          %p186 = pneg %p83
        $region34: #{tpu_custom_call.1} parent=27 // pred_check_branch
          %188 = sbr.rel (%p186) target = $region36
        $region35: #{tpu_custom_call.1} parent=27 // pred_region
          %189 = dma.done %s182, 32
        $region36: #{tpu_custom_call.1} parent=27 // pred_fallthru
          _
        %s190 = sand.u32 %s42, 1
        %s191 = scalar_lea.sflag [#allocation5], %s190
        %s192 = sand.u32 %s42, 1
        %s193 = smul.addr %s192, 8
        %s194 = scalar_lea.vmem [#allocation4], %s193
        %p195 = pneg %p55
        %p196 = pneg %p52
        %s197 = sand.u32 %s70, 1
        %s198 = scalar_lea.sflag [#allocation8], %s197
        %s199 = sand.u32 %s70, 1
        %s200 = smul.addr %s199, 2
        %s201 = scalar_lea.vmem [#allocation7], %s200
        %p202 = pneg %p83
        %p203 = pneg %p80
        %p204 = pneg %p104
        %p205 = pneg %p101
        %s206 = smul.u32 2, %s25
        %s207 = smul.u32 2, %s25
        %p208 = scmp.eq.s32.totalorder %s24, 0
        %p209 = scmp.eq.s32.totalorder %s25, 0
        %p210 = pnand %p208, %p209
        %p211 = pneg %p210
        // Predicated region
        $region37: #{tpu_custom_call.1} parent=27 // pred_check
          _
        $region38: #{tpu_custom_call.1} parent=27 // pred_check_branch
          %213 = sbr.rel (%p210) target = $region40
        $region39: #{tpu_custom_call.1} parent=27 // pred_region
          %vm214 = vcmask 0
          %215 = vst.msk [vmem:[#allocation2] sm:$0x1] %vm214, 0.0
          %216 = vst.msk [vmem:[#allocation3] sm:$0x1] %vm214, 0.0
        $region40: #{tpu_custom_call.1} parent=27 // pred_fallthru
          _
        %v217 = vld [vmem:[%s176] sm:$0xff]
        %v218 = vld [vmem:[%s185] sm:$0x3]
        %v220 = vcombine.high %v217, %v217
        %vm222 = vcmask 1043456
        %v223 = vsel %vm222, %v217, -inf
        %v224 = vrot.slane %v223, 4
        %v225 = vmax.f32 %v223, %v224
        %v226 = vrot.slane %v225, 2
        %v227 = vmax.f32 %v225, %v226
        %v228 = vrot.slane %v227, 1
        %v229 = vmax.f32 %v227, %v228
        %v230 = vsel %vm222, %v220, -inf
        %v231 = vrot.slane %v230, 4
        %v232 = vmax.f32 %v230, %v231
        %v233 = vrot.slane %v232, 2
        %v234 = vmax.f32 %v232, %v233
        %v235 = vrot.slane %v234, 1
        %v236 = vmax.f32 %v234, %v235
        %v239 = vcombine.low %v229, %v236
        %v241 = vsub.f32 %v217, %v239
        %v242 = vmul.f32 %v241, 1.442695
        %v243 = vpow.pop %v242
        %v245 = vcombine.high %v243, %v243
        %v247 = vsel %vm222, %v243, 0.0
        %v248 = vrot.slane %v247, 4
        %v249 = vadd.f32 %v247, %v248
        %v250 = vrot.slane %v249, 2
        %v251 = vadd.f32 %v249, %v250
        %v252 = vrot.slane %v251, 1
        %v253 = vadd.f32 %v251, %v252
        %v254 = vsel %vm222, %v245, 0.0
        %v255 = vrot.slane %v254, 4
        %v256 = vadd.f32 %v254, %v255
        %v257 = vrot.slane %v256, 2
        %v258 = vadd.f32 %v256, %v257
        %v259 = vrot.slane %v258, 1
        %v260 = vadd.f32 %v258, %v259
        %v261 = vlog2.pop %v253
        %v262 = vmul.f32 %v261, 0.6931472
        %v263 = vlog2.pop %v260
        %v264 = vmul.f32 %v263, 0.6931472
        %v265 = vadd.f32 %v229, %v262
        %v266 = vadd.f32 %v236, %v264
        %s267 = smul.u32 %s25, 256
        %v268 = vlaneseq
        %v269 = vand.u32 %v268, 127
        %v270 = vadd.s32 %v269, 128
        %v271 = vstv %s267
        %v272 = vadd.s32 %v271, %v269
        %v273 = vadd.s32 %v271, %v270
        %vm274 = vcmp.ne.s32.totalorder %v218, 255
        %vm275 = vcmp.lt.s32.totalorder %v272, 256
        %vm276 = vcmp.lt.s32.totalorder %v273, 256
        %v277 = vsel %vm275, 1, 0
        %v278 = vsel %vm276, 1, 0
        %v279 = vcombine.low %v277, %v278
        %v281 = vunpack.c.l.s4 1966171168
        %v282 = vunpack.c.0.s8 %v281
        %v283 = vlaneseq
        %v284 = vshrl.u32 %v283, 7
        %v285 = vsub.s32 %v282, %v284
        %v286 = vrot.slane %v279, %v285
        %v288 = vunpack.c.l.s4 1966171168
        %v289 = vunpack.c.0.s8 %v288
        %v290 = vlaneseq
        %v291 = vshrl.u32 %v290, 7
        %v292 = vsub.s32 %v289, %v291
        %v293 = vrot.slane %v286, %v292
        %vm294 = vcmp.ne.s32.totalorder %v293, 0
        %vm295 = vmand %vm274, %vm294
        %v296 = vsel %vm295, %v218, 0
        %v297 = vlaneseq
        %v298 = vshrl.u32 %v297, 7
        %v299 = vlaneseq
        %v300 = vshrl.u32 %v299, 7
        %v301 = vsub.s32 0, %v300
        %v302 = vrot.slane %v296, %v301
        %v303 = vlaneseq
        %v304 = vshrl.u32 %v303, 7
        %v305 = vsub.s32 1, %v304
        %v306 = vrot.slane %v296, %v305
        %vm307 = vcmp.eq.s32.totalorder %v298, %v302
        %vm308 = vcmp.eq.s32.totalorder %v298, %v306
        %v309 = vsel %vm307, %v217, 0.0
        %v310 = vsel %vm308, %v220, 0.0
        %v311 = vsel %vm222, %v309, 0.0
        %v312 = vrot.slane %v311, 4
        %v313 = vadd.f32 %v311, %v312
        %v314 = vrot.slane %v313, 2
        %v315 = vadd.f32 %v313, %v314
        %v316 = vrot.slane %v315, 1
        %v317 = vadd.f32 %v315, %v316
        %v318 = vsel %vm222, %v310, 0.0
        %v319 = vrot.slane %v318, 4
        %v320 = vadd.f32 %v318, %v319
        %v321 = vrot.slane %v320, 2
        %v322 = vadd.f32 %v320, %v321
        %v323 = vrot.slane %v322, 1
        %v324 = vadd.f32 %v322, %v323
        %v325 = vsub.f32 %v265, %v317
        %v326 = vsub.f32 %v266, %v324
        %v329 = vcombine.low %v325, %v326
        %v331 = vunpack.c.l.s4 1966171168
        %v332 = vunpack.c.0.s8 %v331
        %v333 = vlaneseq
        %v334 = vshrl.u32 %v333, 7
        %v335 = vsub.s32 %v332, %v334
        %v336 = vrot.slane %v329, %v335
        %v338 = vunpack.c.l.s4 1966171168
        %v339 = vunpack.c.0.s8 %v338
        %v340 = vlaneseq
        %v341 = vshrl.u32 %v340, 7
        %v342 = vsub.s32 %v339, %v341
        %v343 = vrot.slane %v336, %v342
        %v345 = vsel %vm295, %v343, 0.0
        %v346 = vld [vmem:[#allocation2] sm:$0x1]
        %v348 = vlaneseq
        %v349 = vshrl.u32 %v348, 7
        %v350 = vsub.s32 0, %v349
        %v351 = vrot.slane %v345, %v350
        %v352 = vlaneseq
        %v353 = vshrl.u32 %v352, 7
        %v354 = vsub.s32 1, %v353
        %v355 = vrot.slane %v345, %v354
        %vm358 = vcmask 1040384
        %v359 = vsel %vm358, %v351, 0.0
        %v360 = vsel %vm358, %v355, 0.0
        %v361 = vadd.f32 %v359, %v360
        %362 = vadd.xlane.f32.xlu0 %v361
        %v363 = vpop.xlane.xlu0 %362
        %v364 = vadd.f32 %v346, %v363
        %vm365 = vcmask 0
        %366 = vst.msk [vmem:[#allocation2] sm:$0x1] %vm365, %v364
        %v367 = vld [vmem:[#allocation3] sm:$0x1]
        %v368 = vsel %vm295, 1, 0
        %v369 = vcvt.s32.f32 %v368
        %v371 = vlaneseq
        %v372 = vshrl.u32 %v371, 7
        %v373 = vsub.s32 0, %v372
        %v374 = vrot.slane %v369, %v373
        %v375 = vlaneseq
        %v376 = vshrl.u32 %v375, 7
        %v377 = vsub.s32 1, %v376
        %v378 = vrot.slane %v369, %v377
        %v381 = vsel %vm358, %v374, 0.0
        %v382 = vsel %vm358, %v378, 0.0
        %v383 = vadd.f32 %v381, %v382
        %384 = vadd.xlane.f32.xlu0 %v383
        %v385 = vpop.xlane.xlu0 %384
        %v386 = vadd.f32 %v367, %v385
        %387 = vst.msk [vmem:[#allocation3] sm:$0x1] %vm365, %v386
        %p388 = scmp.eq.s32.totalorder %s24, 1
        %p389 = pnand %p388, %p209
        %p390 = pneg %p389
        // Predicated region
        $region41: #{tpu_custom_call.1} parent=27 // pred_check
          _
        $region42: #{tpu_custom_call.1} parent=27 // pred_check_branch
          %392 = sbr.rel (%p389) target = $region44
        $region43: #{tpu_custom_call.1} parent=27 // pred_region
          %v393 = vld [vmem:[#allocation2] sm:$0x1]
          %v394 = vld [vmem:[#allocation3] sm:$0x1]
          %v395 = vrcp.pop %v394
          %v396 = vmul.f32 %v393, %v395
          %v397 = vsub.f32 0.0, %v396
          %v398 = vmul.f32 %v397, 1.442695
          %v399 = vpow.pop %v398
          %v400 = vsub.f32 1.0, %v399
          %v401 = vmul.f32 %v400, %v400
          %v402 = vsub.f32 0.0, %v401
          %v403 = vmul.f32 %v402, 0.5
          %v404 = vmul.f32 %v403, %v397
          %405 = vst.msk [vmem:[#allocation9] sm:$0x1] %vm365, %v404
        $region44: #{tpu_custom_call.1} parent=27 // pred_fallthru
          _
        // Predicated region
        $region45: #{tpu_custom_call.1} parent=27 // pred_check
          %p406 = pneg %p101
        $region46: #{tpu_custom_call.1} parent=27 // pred_check_branch
          %408 = sbr.rel (%p406) target = $region48
        $region47: #{tpu_custom_call.1} parent=27 // pred_region
          %s410 = ssub.s32 16, 16
          %411 = vsyncadd [#allocation6], %s410
          %s413 = sshll.u32 [#allocation9], 4
          %s414 = int_to_ptr.vmem [resolvable:$true] %s413
          %416 = dma.vmem_to_hbm [thread:$0]  %s414, 16, %s2, [#allocation6]
        $region48: #{tpu_custom_call.1} parent=27 // pred_fallthru
          _
        // Predicated region
        $region49: #{tpu_custom_call.1} parent=27 // pred_check
          %p417 = pneg %p101
        $region50: #{tpu_custom_call.1} parent=27 // pred_check_branch
          %419 = sbr.rel (%p417) target = $region52
        $region51: #{tpu_custom_call.1} parent=27 // pred_region
          %420 = dma.done [#allocation6], 16
        $region52: #{tpu_custom_call.1} parent=27 // pred_fallthru
          _
      $region28: #{tpu_custom_call.1} parent=5 // pred_fallthru
        _
      %p421 = scmp.le.s32.totalorder 2, %s15
      // Predicated region
      $region53: #{tpu_custom_call.1} parent=5 // pred_check
        %p422 = pneg %p421
      $region54: #{tpu_custom_call.1} parent=5 // pred_check_branch
        %424 = sbr.rel (%p422) target = $region56
      $region55: #{tpu_custom_call.1} parent=5 // pred_region
        %s425 = ssub.s32 %s15, 2
      $region56: #{tpu_custom_call.1} parent=5 // pred_fallthru
        _
    $region6: #{tpu_custom_call.1} parent=1 // loop_footer
      %s19 = sadd.s32 1, %s15
    $region7: #{tpu_custom_call.1} parent=1 // loop_footer_branch
      %14 = sbr.rel target = $region3
    $region8: #{tpu_custom_call.1} parent=1 // loop_exit
      _
    %426 = vsyncpa [#allocation5], 1
    %s427 = scalar_lea.sflag [#allocation5], 1
    %428 = vsyncpa %s427, 1
    %429 = vsyncpa [#allocation8], 1
    %s430 = scalar_lea.sflag [#allocation8], 1
    %431 = vsyncpa %s430, 1
    %432 = vsyncpa [#allocation6], 1
    %s433 = scalar_lea.sflag [#allocation6], 1
    %434 = vsyncpa %s433, 1

</llo_original>
